<compile_context>
chip_gen: v6e
topology: v6e:2x2x1
jax: 0.10.0
libtpu: 0.0.40
codegen_flags: <defaults>
</compile_context>

<pallas_src>
import jax
import jax.numpy as jnp
from jax.experimental import pallas as pl
from jax.experimental.pallas import tpu as pltpu

BN_EPS = 1e-5  # PyTorch BatchNorm3d default


# ----------------------------- tiling / chip heuristics -----------------------------

def _chip_budget():
    """(per-block byte budget, vmem_limit_bytes) tuned per TPU generation."""
    kind = ""
    try:
        kind = jax.devices()[0].device_kind.lower()
    except Exception:
        pass
    if "v7" in kind:
        # 64 MiB physical VMEM, 3.2 TB/s HBM: big blocks, but keep 2x buffers < 32 MiB.
        return 12 << 20, 30 << 20
    # v5e / v6e: 128 MiB physical VMEM; raise the scoped limit past v5e's 16 MiB default.
    return 8 << 20, 28 << 20


def _num_tensorcores():
    """TensorCores per device (2 on v7x, 1 on v5e/v6e)."""
    try:
        dev = jax.devices()[0]
        n = getattr(dev, "num_cores", None)
        if isinstance(n, int) and 1 <= n <= 8:
            return min(n, 2)
        if "v7" in dev.device_kind.lower():
            return 2
    except Exception:
        pass
    return 1


def _choose_tiles(S, NC, block_budget_bytes):
    """Row tile over N*C (guards very large NC) and lane tile over S.

    The lane tile is a multiple of 128 sized to the per-block byte budget; the grid is
    cdiv-based and ragged tails are masked inside the kernels (no padding)."""
    tile_nc = NC if NC <= 1024 else 1024
    if S <= 128:
        return tile_nc, S                      # full-extent lane block is always legal
    s_up = -(-S // 128) * 128
    lanes = max(128, (block_budget_bytes // (4 * tile_nc)) // 128 * 128)
    return tile_nc, min(lanes, s_up)


# --------------------------------- Pallas kernels -----------------------------------

def _pool_sums(x2d, *, S, tile_nc, tile_s, R, P, T, num_tiles, vmem_limit):
    """Spatial partial sums: (NC, S) -> (P, NC, 1). Segments combined / scaled in JAX."""
    NC = x2d.shape[0]
    needs_mask = (S % tile_s != 0) or (P * T != num_tiles)

    def kernel(x_ref, o_ref):
        p = pl.program_id(1)
        s = pl.program_id(2)

        @pl.when(s == 0)
        def _():
            o_ref[...] = jnp.zeros_like(o_ref)

        x = x_ref[...]
        if needs_mask:
            # Mask by the *logical* tile index so clamped (over-run) and ragged-tail
            # tiles contribute exactly zero.
            step = p * T + s
            lane = jax.lax.broadcasted_iota(jnp.int32, x.shape, 1) + step * tile_s
            x = jnp.where(lane < S, x, 0.0)
        o_ref[...] += jnp.sum(x, axis=-1, keepdims=True)

    if P * T == num_tiles:
        x_index = lambda r, p, s: (r, p * T + s)
    else:
        # Last segment over-runs: clamp the fetch (data is masked off above).
        x_index = lambda r, p, s: (r, jnp.minimum(p * T + s, num_tiles - 1))

    return pl.pallas_call(
        kernel,
        out_shape=jax.ShapeDtypeStruct((P, NC, 1), jnp.float32),
        grid_spec=pltpu.PrefetchScalarGridSpec(
            num_scalar_prefetch=0,
            grid=(R, P, T),
            in_specs=[pl.BlockSpec((tile_nc, tile_s), x_index)],
            out_specs=pl.BlockSpec((None, tile_nc, 1), lambda r, p, s: (p, r, 0)),
        ),
        compiler_params=pltpu.CompilerParams(
            dimension_semantics=("parallel", "parallel", "arbitrary"),
            vmem_limit_bytes=vmem_limit),
        cost_estimate=pl.CostEstimate(
            flops=2 * NC * S, transcendentals=0,
            bytes_accessed=NC * S * 4 + P * NC * 4),
    )(x2d)


def _broadcast_vals(vals2d, *, S, tile_nc, tile_s, R, vmem_limit):
    """Stream-write per-(n,c) values broadcast over the spatial axis: (NC,1)->(NC,S).

    Output is written at its true extent; the last (ragged) block is a Pallas-masked
    partial store, so no padding / slicing passes are needed."""
    NC = vals2d.shape[0]
    SB = pl.cdiv(S, tile_s)

    def kernel(v_ref, o_ref):
        o_ref[...] = jnp.broadcast_to(v_ref[...], o_ref.shape)

    return pl.pallas_call(
        kernel,
        out_shape=jax.ShapeDtypeStruct((NC, S), jnp.float32),
        grid_spec=pltpu.PrefetchScalarGridSpec(
            num_scalar_prefetch=0,
            grid=(R, SB),
            in_specs=[pl.BlockSpec((tile_nc, 1), lambda r, s: (r, 0))],
            out_specs=pl.BlockSpec((tile_nc, tile_s), lambda r, s: (r, s)),
        ),
        compiler_params=pltpu.CompilerParams(
            dimension_semantics=("parallel", "parallel"),
            vmem_limit_bytes=vmem_limit),
        cost_estimate=pl.CostEstimate(
            flops=NC * S, transcendentals=0,
            bytes_accessed=NC * S * 4 + NC * 4),
    )(vals2d)


# ---------------------------------- tiny (N,C) head ---------------------------------

def _head(pooled, w1t, b1, gamma, beta):
    """conv1x1 -> BN(train) -> ReLU, broadcast-upsample, conv1x1 -> BN -> ReLU, conv1x1.

    Runs on a tiny (N, C) tensor, so it is plain JAX (hoisted out of the kernels).
    The second BN's batch stats over (N, D*H*W) collapse exactly to stats over N
    because the trilinear upsample from (1,1,1) is a pure spatial broadcast."""
    def bn_relu(u):
        mu = jnp.mean(u, axis=0, keepdims=True)
        var = jnp.mean((u - mu) ** 2, axis=0, keepdims=True)
        return jnp.maximum((u - mu) * jax.lax.rsqrt(var + BN_EPS) * gamma + beta, 0.0)

    y = bn_relu(pooled @ w1t + b1)
    z = bn_relu(y @ w1t + b1)
    return z @ w1t + b1  # (N, C_out)


# ------------------------------------- forward --------------------------------------

def aspp_forward(x, params, *, block_bytes=None, segments=None):
    """Pallas ASPP.forward. x: (N, C_in, D, H, W) float32 (NCDHW)."""
    w1, b1, gamma, beta = params
    N, Cin, D, H, W = x.shape
    Cout = w1.shape[0]
    assert Cin == Cout, "PyTorch module requires in_channels == out_channels to run"
    S = D * H * W
    NC = N * Cin

    x2d = x.reshape(NC, S).astype(jnp.float32)

    budget, vmem_limit = _chip_budget()
    if block_bytes is not None:
        budget = block_bytes
    tile_nc, tile_s = _choose_tiles(S, NC, budget)
    R = pl.cdiv(NC, tile_nc)
    num_tiles = pl.cdiv(S, tile_s)
    P = segments if segments is not None else _num_tensorcores()
    P = max(1, min(P, num_tiles))
    T = pl.cdiv(num_tiles, P)

    # AdaptiveAvgPool3d(1): per-segment partial sums, combined + scaled in JAX.
    sums = _pool_sums(x2d, S=S, tile_nc=tile_nc, tile_s=tile_s, R=R, P=P, T=T,
                      num_tiles=num_tiles, vmem_limit=vmem_limit)
    pooled = (jnp.sum(sums, axis=0)[:, 0] * (1.0 / S)).reshape(N, Cin)

    # Tiny matmul/BN head on (N, C), then broadcast the per-(n,c) values spatially.
    vals = _head(pooled, w1.T, b1, gamma, beta)                     # (N, C_out)
    out2d = _broadcast_vals(vals.reshape(NC, 1), S=S, tile_nc=tile_nc,
                            tile_s=tile_s, R=R, vmem_limit=vmem_limit)
    return out2d.reshape(N, Cout, D, H, W)


# ------------------------------------ reference -------------------------------------

def aspp_reference(x, params):
    """Plain-JAX reference of the PyTorch forward's returned value."""
    w1, b1, gamma, beta = params
    N, Cin, D, H, W = x.shape
    Cout = w1.shape[0]

    def conv1x1(t):
        return jnp.einsum("ncdhw,oc->nodhw", t, w1) + b1[None, :, None, None, None]

    def bn_relu(t):
        mu = jnp.mean(t, axis=(0, 2, 3, 4), keepdims=True)
        var = jnp.mean((t - mu) ** 2, axis=(0, 2, 3, 4), keepdims=True)
        tn = (t - mu) / jnp.sqrt(var + BN_EPS)
        return jax.nn.relu(tn * gamma[None, :, None, None, None]
                           + beta[None, :, None, None, None])

    pooled = jnp.mean(x, axis=(2, 3, 4), keepdims=True)      # AdaptiveAvgPool3d(1)
    y = bn_relu(conv1x1(pooled))
    y_up = jnp.broadcast_to(y, (N, Cout, D, H, W))            # trilinear from (1,1,1)
    z = bn_relu(conv1x1(y_up))
    return conv1x1(z)


if __name__ == "__main__":
    key = jax.random.PRNGKey(0)
    kx, kw, kb, kg, kbt = jax.random.split(key, 5)

    N, C = 2, 8
    # conv_1x1: Conv3d(C, C, kernel_size=1) -> weight (C, C, 1, 1, 1) stored as (C, C).
    w1 = 0.2 * jax.random.normal(kw, (C, C), dtype=jnp.float32)
    b1 = 0.1 * jax.random.normal(kb, (C,), dtype=jnp.float32)
    gamma = 1.0 + 0.1 * jax.random.normal(kg, (C,), dtype=jnp.float32)
    beta = 0.1 * jax.random.normal(kbt, (C,), dtype=jnp.float32)
    params = (w1, b1, gamma, beta)

    # 1) 128-aligned spatial size (S = 256), default tiling.
    x1 = jax.random.normal(kx, (N, C, 4, 8, 8), dtype=jnp.float32)
    o1 = jax.block_until_ready(aspp_forward(x1, params))
    r1 = aspp_reference(x1, params)
    assert o1.shape == x1.shape
    assert jnp.allclose(o1, r1, atol=1e-4, rtol=1e-4), float(jnp.max(jnp.abs(o1 - r1)))

    # 2) Spatial size smaller than one vreg row (S = 105): full-extent lane block path.
    x2 = jax.random.normal(kx, (N, C, 3, 5, 7), dtype=jnp.float32)
    o2 = jax.block_until_ready(aspp_forward(x2, params))
    r2 = aspp_reference(x2, params)
    assert jnp.allclose(o2, r2, atol=1e-4, rtol=1e-4), float(jnp.max(jnp.abs(o2 - r2)))

    # 3) Ragged multi-tile path (S = 288): force 128-lane blocks + 2 reduction segments
    #    to exercise the masked tail, clamped index map, and partial broadcast store.
    x3 = jax.random.normal(kx, (N, C, 4, 8, 9), dtype=jnp.float32)
    o3 = jax.block_until_ready(
        aspp_forward(x3, params, block_bytes=N * C * 128 * 4, segments=2))
    r3 = aspp_reference(x3, params)
    assert jnp.allclose(o3, r3, atol=1e-4, rtol=1e-4), float(jnp.max(jnp.abs(o3 - r3)))

    print("KERNEL_OK")
</pallas_src>

<mosaic_0001>
module attributes {stable_mosaic.version = 11 : i64} {
  func.func @kernel(%arg0: i32, %arg1: i32, %arg2: i32, %arg3: memref<16x256xf32, #tpu.memory_space<vmem>>, %arg4: memref<1x16x1xf32, #tpu.memory_space<vmem>>) attributes {dimension_semantics = [#tpu.dimension_semantics<parallel>, #tpu.dimension_semantics<parallel>, #tpu.dimension_semantics<arbitrary>], iteration_bounds = array<i64: 1, 1, 1>, scalar_prefetch = 0 : i64, scratch_operands = 0 : i64, tpu.core_type = #tpu.core_type<tc>, window_params = [{transform_indices = @transform_0, window_bounds = array<i64: 16, 256>}, {transform_indices = @transform_1, window_bounds = array<i64: 1, 16, 1>}]} {
    %c0_i32 = arith.constant 0 : i32
    %0 = arith.cmpi eq, %arg2, %c0_i32 : i32
    %1 = arith.extui %0 : i1 to i32
    %c0_i32_0 = arith.constant 0 : i32
    %2 = arith.cmpi ne, %1, %c0_i32_0 : i32
    scf.if %2 {
      %cst_8 = arith.constant 0.000000e+00 : f32
      %12 = vector.broadcast %cst_8 : f32 to vector<16x1xf32>
      %c0_9 = arith.constant 0 : index
      %c0_10 = arith.constant 0 : index
      %c0_11 = arith.constant 0 : index
      %13 = vector.load %arg4[%c0_9, %c0_10, %c0_11] : memref<1x16x1xf32, #tpu.memory_space<vmem>>, vector<1x16x1xf32>
      %14 = vector.shape_cast %13 : vector<1x16x1xf32> to vector<16x1xf32>
      %15 = vector.shape_cast %12 : vector<16x1xf32> to vector<1x16x1xf32>
      tpu.vector_store %arg4[%c0_9, %c0_10, %c0_11], %15 {strides = array<i32>} : memref<1x16x1xf32, #tpu.memory_space<vmem>>, vector<1x16x1xf32>,
    } else {
    }
    %c0 = arith.constant 0 : index
    %c0_1 = arith.constant 0 : index
    %3 = vector.load %arg3[%c0, %c0_1] : memref<16x256xf32, #tpu.memory_space<vmem>>, vector<16x256xf32>
    %c0_2 = arith.constant 0 : index
    %c0_3 = arith.constant 0 : index
    %c0_4 = arith.constant 0 : index
    %4 = vector.load %arg4[%c0_2, %c0_3, %c0_4] : memref<1x16x1xf32, #tpu.memory_space<vmem>>, vector<1x16x1xf32>
    %5 = vector.shape_cast %4 : vector<1x16x1xf32> to vector<16x1xf32>
    %cst = arith.constant dense<0.000000e+00> : vector<16xf32>
    %6 = vector.multi_reduction <add>, %3, %cst [1] : vector<16x256xf32> to vector<16xf32>
    %7 = vector.shape_cast %6 : vector<16xf32> to vector<16x1xf32>
    %8 = arith.addf %5, %7 : vector<16x1xf32>
    %c0_5 = arith.constant 0 : index
    %c0_6 = arith.constant 0 : index
    %c0_7 = arith.constant 0 : index
    %9 = vector.load %arg4[%c0_5, %c0_6, %c0_7] : memref<1x16x1xf32, #tpu.memory_space<vmem>>, vector<1x16x1xf32>
    %10 = vector.shape_cast %9 : vector<1x16x1xf32> to vector<16x1xf32>
    %11 = vector.shape_cast %8 : vector<16x1xf32> to vector<1x16x1xf32>
    tpu.vector_store %arg4[%c0_5, %c0_6, %c0_7], %11 {strides = array<i32>} : memref<1x16x1xf32, #tpu.memory_space<vmem>>, vector<1x16x1xf32>,
    return
  }
  func.func @transform_0(%arg0: i32, %arg1: i32, %arg2: i32) -> (i32, i32) {
    %c1_i32 = arith.constant 1 : i32
    %0 = arith.muli %arg1, %c1_i32 : i32
    %1 = arith.addi %0, %arg2 : i32
    %c0_i32 = arith.constant 0 : i32
    return %arg0, %1 : i32, i32
  }
  func.func @transform_1(%arg0: i32, %arg1: i32, %arg2: i32) -> (i32, i32, i32) {
    %c0_i32 = arith.constant 0 : i32
    %c0_i32_0 = arith.constant 0 : i32
    return %arg1, %arg0, %c0_i32 : i32, i32, i32
  }
}

</mosaic_0001>

<llo_original>
// kernel: tpu_custom_call.1
$region0: #{tpu_custom_call.1}
  #allocation0 [shape = 'u32[]', space=smem, size = 0x4, offset = 0x4, fixed_abs, tag = 'smem constant byte address 0x4 - core index']
  #allocation1 [shape = 'u32[144,128]{1,0:T(1,128)}', space=vmem, size = 0x12000, scoped, tag = 'internal scratch']
  %s0 = inlined_call_operand.hbm [shape: f32[16,256], index: 0, kind: input, shape index: {}]
  %s1 = inlined_call_operand.vmem [shape: f32[1,16,1], index: 1, kind: output, shape index: {}]
  %s2 = sld [smem:[#allocation0]]
  $region22: #{tpu_custom_call.1} parent=0
    _
  %s4 = ssub.s32 1, %s2
  %s5 = scalar_select 0, %s4, %s2
  $region1: #{tpu_custom_call.1} parent=0
    #allocation2 [shape = 'u8[16384]{0}', space=vmem, size = 0x4000, scoped, tag = 'input window, operand 0, single buffered']
    #allocation3 [shape = 's32[1]{0}', space=sflag, size = 0x4, scoped, tag = 'scoped memory for tpu_custom_call.1']
    %6 = vsyncpa [#allocation3], 0
    // Predicated region
    $region2: #{tpu_custom_call.1} parent=1 // pred_check
      _
    $region3: #{tpu_custom_call.1} parent=1 // pred_check_branch
      %8 = sbr.rel (0) target = $region5
    $region4: #{tpu_custom_call.1} parent=1 // pred_region
      %s9 = sadd.s32 0, 0
      %s10 = smul.u32 2, %s9
      %s12 = ssub.s32 512, 512
      %13 = vsyncadd [#allocation3], %s12
      %s14 = smul.addr %s10, 128
      %s15 = scalar_lea.hbm %s0, %s14
      %s16 = sshll.u32 [#allocation2], 4
      %s17 = int_to_ptr.vmem [resolvable:$true] %s16
      %22 = dma.hbm_to_vmem [thread:$0]  %s15, 512, %s17, [#allocation3], 256, 256, 16
    $region5: #{tpu_custom_call.1} parent=1 // pred_fallthru
      _
    // Predicated region
    $region6: #{tpu_custom_call.1} parent=1 // pred_check
      _
    $region7: #{tpu_custom_call.1} parent=1 // pred_check_branch
      %24 = sbr.rel (0) target = $region9
    $region8: #{tpu_custom_call.1} parent=1 // pred_region
      %25 = dma.done [#allocation3], 512
    $region9: #{tpu_custom_call.1} parent=1 // pred_fallthru
      _
    %s26 = sadd.s32 0, 0
    %s27 = smul.u32 2, %s26
    %p28 = scmp.eq.s32.totalorder 0, 0
    // Predicated region
    $region10: #{tpu_custom_call.1} parent=1 // pred_check
      %p29 = pneg %p28
    $region11: #{tpu_custom_call.1} parent=1 // pred_check_branch
      %31 = sbr.rel (%p29) target = $region13
    $region12: #{tpu_custom_call.1} parent=1 // pred_region
      %vm32 = vcmask 7168
      %33 = vst.msk [vmem:[%s1] sm:$0xff] %vm32, 0.0
      %34 = vst.msk [vmem:[%s1 + $0x8] sm:$0xff] %vm32, 0.0
    $region13: #{tpu_custom_call.1} parent=1 // pred_fallthru
      _
    %v35 = vld [vmem:[#allocation2] sm:$0xff]
    %v36 = vld [vmem:[#allocation2 + $0x8] sm:$0xff]
    %v37 = vld [vmem:[#allocation2 + $0x10] sm:$0xff]
    %v38 = vld [vmem:[#allocation2 + $0x18] sm:$0xff]
    %v39 = vld [vmem:[%s1] sm:$0xff]
    %v40 = vld [vmem:[%s1 + $0x8] sm:$0xff]
    %v41 = vadd.f32 %v35, %v36
    %42 = vadd.xlane.f32.xlu0 %v41
    %v43 = vpop.xlane.xlu0 %42
    %v44 = vadd.f32 %v37, %v38
    %45 = vadd.xlane.f32.xlu0 %v44
    %v46 = vpop.xlane.xlu0 %45
    %v47 = vadd.f32 %v39, %v43
    %v48 = vadd.f32 %v40, %v46
    %vm49 = vcmask 7168
    %50 = vst.msk [vmem:[%s1] sm:$0xff] %vm49, %v47
    %51 = vst.msk [vmem:[%s1 + $0x8] sm:$0xff] %vm49, %v48
    // Predicated region
    $region14: #{tpu_custom_call.1} parent=1 // pred_check
      _
    $region15: #{tpu_custom_call.1} parent=1 // pred_check_branch
      %53 = sbr.rel (0) target = $region17
    $region16: #{tpu_custom_call.1} parent=1 // pred_region
      _
    $region17: #{tpu_custom_call.1} parent=1 // pred_fallthru
      _
    // Predicated region
    $region18: #{tpu_custom_call.1} parent=1 // pred_check
      _
    $region19: #{tpu_custom_call.1} parent=1 // pred_check_branch
      %55 = sbr.rel (0) target = $region21
    $region20: #{tpu_custom_call.1} parent=1 // pred_region
      _
    $region21: #{tpu_custom_call.1} parent=1 // pred_fallthru
      _
    %56 = vsyncpa [#allocation3], 1

</llo_original>
